<compile_context>
chip_gen: v7x
topology: tpu7x:2x2x1
jax: 0.10.0
libtpu: 0.0.40
codegen_flags: <defaults>
</compile_context>

<pallas_src>
import jax
import jax.numpy as jnp
from jax import lax
from jax.experimental import pallas as pl
from jax.experimental.pallas import tpu as pltpu


def _lstm_recurrence_kernel(xg_ref, whh_ref, h_out_ref):
    """Serial LSTM recurrence over T steps for one batch block.

    xg_ref : (T, BB, 4H) f32  -- precomputed x_t @ W_ih^T + b_ih + b_hh
    whh_ref: (H, 4H)     f32  -- W_hh^T (resident across the loop)
    h_out  : (BB, H)     f32  -- hidden state after the last timestep
    """
    T, BB, H4 = xg_ref.shape
    H = H4 // 4
    whh = whh_ref[...]                       # hoisted load, stays in vregs

    def step(t, carry):
        h, c = carry
        # Only the tiny h @ W_hh^T remains on the serial critical path.
        gates = xg_ref[t] + jnp.dot(h, whh,
                                    preferred_element_type=jnp.float32)
        # PyTorch gate order: i, f, g, o.
        i_g = jax.nn.sigmoid(gates[:, 0 * H:1 * H])
        f_g = jax.nn.sigmoid(gates[:, 1 * H:2 * H])
        g_g = jnp.tanh(gates[:, 2 * H:3 * H])
        o_g = jax.nn.sigmoid(gates[:, 3 * H:4 * H])
        c_new = f_g * c + i_g * g_g
        h_new = o_g * jnp.tanh(c_new)
        return (h_new, c_new)

    h0 = jnp.zeros((BB, H), jnp.float32)
    c0 = jnp.zeros((BB, H), jnp.float32)
    # T is small/static here -> full unroll gives the LLO scheduler visibility.
    h_last, _ = lax.fori_loop(0, T, step, (h0, c0), unroll=True)
    h_out_ref[...] = h_last


def lstm_model_forward(x, w_ih, w_hh, b_ih, b_hh, w_fc, b_fc):
    """x: (B, T, D) float32. Returns logits (B, num_classes) float32."""
    B, T, D = x.shape
    H = w_hh.shape[1]
    H4 = 4 * H

    # --- Hoisted input projection (all timesteps at once, f32) ------------
    # Output produced time-major (T, B, 4H) directly; both LSTM biases folded
    # here so the per-step kernel only adds one precomputed slab.
    xg = (jnp.einsum("btd,dg->tbg", x, w_ih.T,
                     preferred_element_type=jnp.float32)
          + (b_ih + b_hh))                                  # (T, B, 4H) f32

    whh_t = w_hh.T.astype(jnp.float32)                      # (H, 4H) f32

    # Batch blocking: blocks of 8 rows -> a "parallel" grid axis that megacore
    # (v7x, 2 TCs) can shard; the whole recurrence stays inside one grid step.
    bb = 8 if (B % 8 == 0) else B
    grid = (B // bb,)

    h_last = pl.pallas_call(
        _lstm_recurrence_kernel,
        out_shape=jax.ShapeDtypeStruct((B, H), jnp.float32),
        grid_spec=pltpu.PrefetchScalarGridSpec(
            num_scalar_prefetch=0,
            grid=grid,
            in_specs=[
                pl.BlockSpec((T, bb, H4), lambda b: (0, b, 0)),  # gate slab
                pl.BlockSpec((H, H4), lambda b: (0, 0)),         # W_hh^T
            ],
            out_specs=pl.BlockSpec((bb, H), lambda b: (b, 0)),
        ),
        compiler_params=pltpu.CompilerParams(
            dimension_semantics=("parallel",)),
    )(xg, whh_t)

    # Dropout(p=0.2) in eval mode == identity; FC head in XLA f32 (tiny, used
    # once, keeps the kernel output free of the 8-lane-wide matmul).
    return h_last @ w_fc.T + b_fc


def _reference_forward(x, w_ih, w_hh, b_ih, b_hh, w_fc, b_fc):
    """Pure-JAX f32 reference matching torch.nn.LSTM + Linear (eval mode)."""
    B, T, D = x.shape
    H = w_hh.shape[1]

    def step(carry, x_t):
        h, c = carry
        gates = x_t @ w_ih.T + h @ w_hh.T + b_ih + b_hh
        i = jax.nn.sigmoid(gates[:, 0 * H:1 * H])
        f = jax.nn.sigmoid(gates[:, 1 * H:2 * H])
        g = jnp.tanh(gates[:, 2 * H:3 * H])
        o = jax.nn.sigmoid(gates[:, 3 * H:4 * H])
        c = f * c + i * g
        h = o * jnp.tanh(c)
        return (h, c), None

    h0 = jnp.zeros((B, H), jnp.float32)
    c0 = jnp.zeros((B, H), jnp.float32)
    (h_last, _), _ = jax.lax.scan(step, (h0, c0), jnp.transpose(x, (1, 0, 2)))
    return h_last @ w_fc.T + b_fc


if __name__ == "__main__":
    # Small shapes consistent with the module: batch=8, seq=8, input=16,
    # hidden=32, num_classes=8.
    B, T, D, H, C = 8, 8, 16, 32, 8

    key = jax.random.PRNGKey(0)
    ks = jax.random.split(key, 8)
    bound = 1.0 / jnp.sqrt(H)   # PyTorch default uniform(-1/sqrt(H), 1/sqrt(H))

    x = jax.random.normal(ks[0], (B, T, D), dtype=jnp.float32)
    w_ih = jax.random.uniform(ks[1], (4 * H, D), jnp.float32, -bound, bound)
    w_hh = jax.random.uniform(ks[2], (4 * H, H), jnp.float32, -bound, bound)
    b_ih = jax.random.uniform(ks[3], (4 * H,), jnp.float32, -bound, bound)
    b_hh = jax.random.uniform(ks[4], (4 * H,), jnp.float32, -bound, bound)
    w_fc = jax.random.uniform(ks[5], (C, H), jnp.float32, -bound, bound)
    b_fc = jax.random.uniform(ks[6], (C,), jnp.float32, -bound, bound)

    out = lstm_model_forward(x, w_ih, w_hh, b_ih, b_hh, w_fc, b_fc)
    out = jax.block_until_ready(out)

    ref = _reference_forward(x, w_ih, w_hh, b_ih, b_hh, w_fc, b_fc)
    assert out.shape == (B, C)
    # Pure f32 everywhere now -> tight tolerance vs the f32 reference.
    assert jnp.allclose(out, ref, atol=1e-4, rtol=1e-4), "mismatch vs reference"

    print("KERNEL_OK")
</pallas_src>

<mosaic_0001>
module attributes {stable_mosaic.version = 11 : i64} {
  func.func @_lstm_recurrence_kernel(%arg0: i32, %arg1: memref<8x8x128xf32, #tpu.memory_space<vmem>>, %arg2: memref<32x128xf32, #tpu.memory_space<vmem>>, %arg3: memref<8x32xf32, #tpu.memory_space<vmem>>) attributes {dimension_semantics = [#tpu.dimension_semantics<parallel>], iteration_bounds = array<i64: 1>, scalar_prefetch = 0 : i64, scratch_operands = 0 : i64, tpu.core_type = #tpu.core_type<tc>, window_params = [{transform_indices = @transform_0, window_bounds = array<i64: 8, 8, 128>}, {pipeline_mode = #tpu.pipeline_mode<synchronous>, transform_indices = @transform_1, window_bounds = array<i64: 32, 128>}, {transform_indices = @transform_2, window_bounds = array<i64: 8, 32>}]} {
    %c0 = arith.constant 0 : index
    %c0_0 = arith.constant 0 : index
    %0 = vector.load %arg2[%c0, %c0_0] : memref<32x128xf32, #tpu.memory_space<vmem>>, vector<32x128xf32>
    %cst = arith.constant 0.000000e+00 : f32
    %1 = vector.broadcast %cst : f32 to vector<8x32xf32>
    %cst_1 = arith.constant 0.000000e+00 : f32
    %2 = vector.broadcast %cst_1 : f32 to vector<8x32xf32>
    %c0_i32 = arith.constant 0 : i32
    %3 = arith.index_cast %c0_i32 : i32 to index
    %c0_2 = arith.constant 0 : index
    %c0_3 = arith.constant 0 : index
    %4 = vector.load %arg1[%3, %c0_2, %c0_3] : memref<8x8x128xf32, #tpu.memory_space<vmem>>, vector<1x8x128xf32>
    %5 = vector.shape_cast %4 : vector<1x8x128xf32> to vector<8x128xf32>
    %cst_4 = arith.constant dense<0.000000e+00> : vector<8x128xf32>
    %6 = tpu.matmul %1, %0, %cst_4 {dimension_numbers = #tpu.dot_dimension_numbers<[1], [0], [0], [1], [0, 0, 1, 1], [], []>} : vector<8x32xf32>, vector<32x128xf32>, vector<8x128xf32> -> vector<8x128xf32>
    %7 = arith.addf %5, %6 : vector<8x128xf32>
    %8 = vector.extract_strided_slice %7 {offsets = [0, 0], sizes = [8, 32], strides = [1, 1]} : vector<8x128xf32> to vector<8x32xf32>
    %9 = arith.negf %8 : vector<8x32xf32>
    %10 = math.exp %9 : vector<8x32xf32>
    %cst_5 = arith.constant 1.000000e+00 : f32
    %11 = vector.broadcast %cst_5 : f32 to vector<8x32xf32>
    %12 = arith.addf %11, %10 : vector<8x32xf32>
    %13 = arith.divf %11, %12 : vector<8x32xf32>
    %14 = vector.extract_strided_slice %7 {offsets = [0, 32], sizes = [8, 32], strides = [1, 1]} : vector<8x128xf32> to vector<8x32xf32>
    %15 = arith.negf %14 : vector<8x32xf32>
    %16 = math.exp %15 : vector<8x32xf32>
    %cst_6 = arith.constant 1.000000e+00 : f32
    %17 = vector.broadcast %cst_6 : f32 to vector<8x32xf32>
    %18 = arith.addf %17, %16 : vector<8x32xf32>
    %19 = arith.divf %17, %18 : vector<8x32xf32>
    %20 = vector.extract_strided_slice %7 {offsets = [0, 64], sizes = [8, 32], strides = [1, 1]} : vector<8x128xf32> to vector<8x32xf32>
    %21 = math.tanh %20 : vector<8x32xf32>
    %22 = vector.extract_strided_slice %7 {offsets = [0, 96], sizes = [8, 32], strides = [1, 1]} : vector<8x128xf32> to vector<8x32xf32>
    %23 = arith.negf %22 : vector<8x32xf32>
    %24 = math.exp %23 : vector<8x32xf32>
    %cst_7 = arith.constant 1.000000e+00 : f32
    %25 = vector.broadcast %cst_7 : f32 to vector<8x32xf32>
    %26 = arith.addf %25, %24 : vector<8x32xf32>
    %27 = arith.divf %25, %26 : vector<8x32xf32>
    %28 = arith.mulf %19, %2 : vector<8x32xf32>
    %29 = arith.mulf %13, %21 : vector<8x32xf32>
    %30 = arith.addf %28, %29 : vector<8x32xf32>
    %31 = math.tanh %30 : vector<8x32xf32>
    %32 = arith.mulf %27, %31 : vector<8x32xf32>
    %c1_i32 = arith.constant 1 : i32
    %33 = arith.index_cast %c1_i32 : i32 to index
    %c0_8 = arith.constant 0 : index
    %c0_9 = arith.constant 0 : index
    %34 = vector.load %arg1[%33, %c0_8, %c0_9] : memref<8x8x128xf32, #tpu.memory_space<vmem>>, vector<1x8x128xf32>
    %35 = vector.shape_cast %34 : vector<1x8x128xf32> to vector<8x128xf32>
    %cst_10 = arith.constant dense<0.000000e+00> : vector<8x128xf32>
    %36 = tpu.matmul %32, %0, %cst_10 {dimension_numbers = #tpu.dot_dimension_numbers<[1], [0], [0], [1], [0, 0, 1, 1], [], []>} : vector<8x32xf32>, vector<32x128xf32>, vector<8x128xf32> -> vector<8x128xf32>
    %37 = arith.addf %35, %36 : vector<8x128xf32>
    %38 = vector.extract_strided_slice %37 {offsets = [0, 0], sizes = [8, 32], strides = [1, 1]} : vector<8x128xf32> to vector<8x32xf32>
    %39 = arith.negf %38 : vector<8x32xf32>
    %40 = math.exp %39 : vector<8x32xf32>
    %cst_11 = arith.constant 1.000000e+00 : f32
    %41 = vector.broadcast %cst_11 : f32 to vector<8x32xf32>
    %42 = arith.addf %41, %40 : vector<8x32xf32>
    %43 = arith.divf %41, %42 : vector<8x32xf32>
    %44 = vector.extract_strided_slice %37 {offsets = [0, 32], sizes = [8, 32], strides = [1, 1]} : vector<8x128xf32> to vector<8x32xf32>
    %45 = arith.negf %44 : vector<8x32xf32>
    %46 = math.exp %45 : vector<8x32xf32>
    %cst_12 = arith.constant 1.000000e+00 : f32
    %47 = vector.broadcast %cst_12 : f32 to vector<8x32xf32>
    %48 = arith.addf %47, %46 : vector<8x32xf32>
    %49 = arith.divf %47, %48 : vector<8x32xf32>
    %50 = vector.extract_strided_slice %37 {offsets = [0, 64], sizes = [8, 32], strides = [1, 1]} : vector<8x128xf32> to vector<8x32xf32>
    %51 = math.tanh %50 : vector<8x32xf32>
    %52 = vector.extract_strided_slice %37 {offsets = [0, 96], sizes = [8, 32], strides = [1, 1]} : vector<8x128xf32> to vector<8x32xf32>
    %53 = arith.negf %52 : vector<8x32xf32>
    %54 = math.exp %53 : vector<8x32xf32>
    %cst_13 = arith.constant 1.000000e+00 : f32
    %55 = vector.broadcast %cst_13 : f32 to vector<8x32xf32>
    %56 = arith.addf %55, %54 : vector<8x32xf32>
    %57 = arith.divf %55, %56 : vector<8x32xf32>
    %58 = arith.mulf %49, %30 : vector<8x32xf32>
    %59 = arith.mulf %43, %51 : vector<8x32xf32>
    %60 = arith.addf %58, %59 : vector<8x32xf32>
    %61 = math.tanh %60 : vector<8x32xf32>
    %62 = arith.mulf %57, %61 : vector<8x32xf32>
    %c2_i32 = arith.constant 2 : i32
    %63 = arith.index_cast %c2_i32 : i32 to index
    %c0_14 = arith.constant 0 : index
    %c0_15 = arith.constant 0 : index
    %64 = vector.load %arg1[%63, %c0_14, %c0_15] : memref<8x8x128xf32, #tpu.memory_space<vmem>>, vector<1x8x128xf32>
    %65 = vector.shape_cast %64 : vector<1x8x128xf32> to vector<8x128xf32>
    %cst_16 = arith.constant dense<0.000000e+00> : vector<8x128xf32>
    %66 = tpu.matmul %62, %0, %cst_16 {dimension_numbers = #tpu.dot_dimension_numbers<[1], [0], [0], [1], [0, 0, 1, 1], [], []>} : vector<8x32xf32>, vector<32x128xf32>, vector<8x128xf32> -> vector<8x128xf32>
    %67 = arith.addf %65, %66 : vector<8x128xf32>
    %68 = vector.extract_strided_slice %67 {offsets = [0, 0], sizes = [8, 32], strides = [1, 1]} : vector<8x128xf32> to vector<8x32xf32>
    %69 = arith.negf %68 : vector<8x32xf32>
    %70 = math.exp %69 : vector<8x32xf32>
    %cst_17 = arith.constant 1.000000e+00 : f32
    %71 = vector.broadcast %cst_17 : f32 to vector<8x32xf32>
    %72 = arith.addf %71, %70 : vector<8x32xf32>
    %73 = arith.divf %71, %72 : vector<8x32xf32>
    %74 = vector.extract_strided_slice %67 {offsets = [0, 32], sizes = [8, 32], strides = [1, 1]} : vector<8x128xf32> to vector<8x32xf32>
    %75 = arith.negf %74 : vector<8x32xf32>
    %76 = math.exp %75 : vector<8x32xf32>
    %cst_18 = arith.constant 1.000000e+00 : f32
    %77 = vector.broadcast %cst_18 : f32 to vector<8x32xf32>
    %78 = arith.addf %77, %76 : vector<8x32xf32>
    %79 = arith.divf %77, %78 : vector<8x32xf32>
    %80 = vector.extract_strided_slice %67 {offsets = [0, 64], sizes = [8, 32], strides = [1, 1]} : vector<8x128xf32> to vector<8x32xf32>
    %81 = math.tanh %80 : vector<8x32xf32>
    %82 = vector.extract_strided_slice %67 {offsets = [0, 96], sizes = [8, 32], strides = [1, 1]} : vector<8x128xf32> to vector<8x32xf32>
    %83 = arith.negf %82 : vector<8x32xf32>
    %84 = math.exp %83 : vector<8x32xf32>
    %cst_19 = arith.constant 1.000000e+00 : f32
    %85 = vector.broadcast %cst_19 : f32 to vector<8x32xf32>
    %86 = arith.addf %85, %84 : vector<8x32xf32>
    %87 = arith.divf %85, %86 : vector<8x32xf32>
    %88 = arith.mulf %79, %60 : vector<8x32xf32>
    %89 = arith.mulf %73, %81 : vector<8x32xf32>
    %90 = arith.addf %88, %89 : vector<8x32xf32>
    %91 = math.tanh %90 : vector<8x32xf32>
    %92 = arith.mulf %87, %91 : vector<8x32xf32>
    %c3_i32 = arith.constant 3 : i32
    %93 = arith.index_cast %c3_i32 : i32 to index
    %c0_20 = arith.constant 0 : index
    %c0_21 = arith.constant 0 : index
    %94 = vector.load %arg1[%93, %c0_20, %c0_21] : memref<8x8x128xf32, #tpu.memory_space<vmem>>, vector<1x8x128xf32>
    %95 = vector.shape_cast %94 : vector<1x8x128xf32> to vector<8x128xf32>
    %cst_22 = arith.constant dense<0.000000e+00> : vector<8x128xf32>
    %96 = tpu.matmul %92, %0, %cst_22 {dimension_numbers = #tpu.dot_dimension_numbers<[1], [0], [0], [1], [0, 0, 1, 1], [], []>} : vector<8x32xf32>, vector<32x128xf32>, vector<8x128xf32> -> vector<8x128xf32>
    %97 = arith.addf %95, %96 : vector<8x128xf32>
    %98 = vector.extract_strided_slice %97 {offsets = [0, 0], sizes = [8, 32], strides = [1, 1]} : vector<8x128xf32> to vector<8x32xf32>
    %99 = arith.negf %98 : vector<8x32xf32>
    %100 = math.exp %99 : vector<8x32xf32>
    %cst_23 = arith.constant 1.000000e+00 : f32
    %101 = vector.broadcast %cst_23 : f32 to vector<8x32xf32>
    %102 = arith.addf %101, %100 : vector<8x32xf32>
    %103 = arith.divf %101, %102 : vector<8x32xf32>
    %104 = vector.extract_strided_slice %97 {offsets = [0, 32], sizes = [8, 32], strides = [1, 1]} : vector<8x128xf32> to vector<8x32xf32>
    %105 = arith.negf %104 : vector<8x32xf32>
    %106 = math.exp %105 : vector<8x32xf32>
    %cst_24 = arith.constant 1.000000e+00 : f32
    %107 = vector.broadcast %cst_24 : f32 to vector<8x32xf32>
    %108 = arith.addf %107, %106 : vector<8x32xf32>
    %109 = arith.divf %107, %108 : vector<8x32xf32>
    %110 = vector.extract_strided_slice %97 {offsets = [0, 64], sizes = [8, 32], strides = [1, 1]} : vector<8x128xf32> to vector<8x32xf32>
    %111 = math.tanh %110 : vector<8x32xf32>
    %112 = vector.extract_strided_slice %97 {offsets = [0, 96], sizes = [8, 32], strides = [1, 1]} : vector<8x128xf32> to vector<8x32xf32>
    %113 = arith.negf %112 : vector<8x32xf32>
    %114 = math.exp %113 : vector<8x32xf32>
    %cst_25 = arith.constant 1.000000e+00 : f32
    %115 = vector.broadcast %cst_25 : f32 to vector<8x32xf32>
    %116 = arith.addf %115, %114 : vector<8x32xf32>
    %117 = arith.divf %115, %116 : vector<8x32xf32>
    %118 = arith.mulf %109, %90 : vector<8x32xf32>
    %119 = arith.mulf %103, %111 : vector<8x32xf32>
    %120 = arith.addf %118, %119 : vector<8x32xf32>
    %121 = math.tanh %120 : vector<8x32xf32>
    %122 = arith.mulf %117, %121 : vector<8x32xf32>
    %c4_i32 = arith.constant 4 : i32
    %123 = arith.index_cast %c4_i32 : i32 to index
    %c0_26 = arith.constant 0 : index
    %c0_27 = arith.constant 0 : index
    %124 = vector.load %arg1[%123, %c0_26, %c0_27] : memref<8x8x128xf32, #tpu.memory_space<vmem>>, vector<1x8x128xf32>
    %125 = vector.shape_cast %124 : vector<1x8x128xf32> to vector<8x128xf32>
    %cst_28 = arith.constant dense<0.000000e+00> : vector<8x128xf32>
    %126 = tpu.matmul %122, %0, %cst_28 {dimension_numbers = #tpu.dot_dimension_numbers<[1], [0], [0], [1], [0, 0, 1, 1], [], []>} : vector<8x32xf32>, vector<32x128xf32>, vector<8x128xf32> -> vector<8x128xf32>
    %127 = arith.addf %125, %126 : vector<8x128xf32>
    %128 = vector.extract_strided_slice %127 {offsets = [0, 0], sizes = [8, 32], strides = [1, 1]} : vector<8x128xf32> to vector<8x32xf32>
    %129 = arith.negf %128 : vector<8x32xf32>
    %130 = math.exp %129 : vector<8x32xf32>
    %cst_29 = arith.constant 1.000000e+00 : f32
    %131 = vector.broadcast %cst_29 : f32 to vector<8x32xf32>
    %132 = arith.addf %131, %130 : vector<8x32xf32>
    %133 = arith.divf %131, %132 : vector<8x32xf32>
    %134 = vector.extract_strided_slice %127 {offsets = [0, 32], sizes = [8, 32], strides = [1, 1]} : vector<8x128xf32> to vector<8x32xf32>
    %135 = arith.negf %134 : vector<8x32xf32>
    %136 = math.exp %135 : vector<8x32xf32>
    %cst_30 = arith.constant 1.000000e+00 : f32
    %137 = vector.broadcast %cst_30 : f32 to vector<8x32xf32>
    %138 = arith.addf %137, %136 : vector<8x32xf32>
    %139 = arith.divf %137, %138 : vector<8x32xf32>
    %140 = vector.extract_strided_slice %127 {offsets = [0, 64], sizes = [8, 32], strides = [1, 1]} : vector<8x128xf32> to vector<8x32xf32>
    %141 = math.tanh %140 : vector<8x32xf32>
    %142 = vector.extract_strided_slice %127 {offsets = [0, 96], sizes = [8, 32], strides = [1, 1]} : vector<8x128xf32> to vector<8x32xf32>
    %143 = arith.negf %142 : vector<8x32xf32>
    %144 = math.exp %143 : vector<8x32xf32>
    %cst_31 = arith.constant 1.000000e+00 : f32
    %145 = vector.broadcast %cst_31 : f32 to vector<8x32xf32>
    %146 = arith.addf %145, %144 : vector<8x32xf32>
    %147 = arith.divf %145, %146 : vector<8x32xf32>
    %148 = arith.mulf %139, %120 : vector<8x32xf32>
    %149 = arith.mulf %133, %141 : vector<8x32xf32>
    %150 = arith.addf %148, %149 : vector<8x32xf32>
    %151 = math.tanh %150 : vector<8x32xf32>
    %152 = arith.mulf %147, %151 : vector<8x32xf32>
    %c5_i32 = arith.constant 5 : i32
    %153 = arith.index_cast %c5_i32 : i32 to index
    %c0_32 = arith.constant 0 : index
    %c0_33 = arith.constant 0 : index
    %154 = vector.load %arg1[%153, %c0_32, %c0_33] : memref<8x8x128xf32, #tpu.memory_space<vmem>>, vector<1x8x128xf32>
    %155 = vector.shape_cast %154 : vector<1x8x128xf32> to vector<8x128xf32>
    %cst_34 = arith.constant dense<0.000000e+00> : vector<8x128xf32>
    %156 = tpu.matmul %152, %0, %cst_34 {dimension_numbers = #tpu.dot_dimension_numbers<[1], [0], [0], [1], [0, 0, 1, 1], [], []>} : vector<8x32xf32>, vector<32x128xf32>, vector<8x128xf32> -> vector<8x128xf32>
    %157 = arith.addf %155, %156 : vector<8x128xf32>
    %158 = vector.extract_strided_slice %157 {offsets = [0, 0], sizes = [8, 32], strides = [1, 1]} : vector<8x128xf32> to vector<8x32xf32>
    %159 = arith.negf %158 : vector<8x32xf32>
    %160 = math.exp %159 : vector<8x32xf32>
    %cst_35 = arith.constant 1.000000e+00 : f32
    %161 = vector.broadcast %cst_35 : f32 to vector<8x32xf32>
    %162 = arith.addf %161, %160 : vector<8x32xf32>
    %163 = arith.divf %161, %162 : vector<8x32xf32>
    %164 = vector.extract_strided_slice %157 {offsets = [0, 32], sizes = [8, 32], strides = [1, 1]} : vector<8x128xf32> to vector<8x32xf32>
    %165 = arith.negf %164 : vector<8x32xf32>
    %166 = math.exp %165 : vector<8x32xf32>
    %cst_36 = arith.constant 1.000000e+00 : f32
    %167 = vector.broadcast %cst_36 : f32 to vector<8x32xf32>
    %168 = arith.addf %167, %166 : vector<8x32xf32>
    %169 = arith.divf %167, %168 : vector<8x32xf32>
    %170 = vector.extract_strided_slice %157 {offsets = [0, 64], sizes = [8, 32], strides = [1, 1]} : vector<8x128xf32> to vector<8x32xf32>
    %171 = math.tanh %170 : vector<8x32xf32>
    %172 = vector.extract_strided_slice %157 {offsets = [0, 96], sizes = [8, 32], strides = [1, 1]} : vector<8x128xf32> to vector<8x32xf32>
    %173 = arith.negf %172 : vector<8x32xf32>
    %174 = math.exp %173 : vector<8x32xf32>
    %cst_37 = arith.constant 1.000000e+00 : f32
    %175 = vector.broadcast %cst_37 : f32 to vector<8x32xf32>
    %176 = arith.addf %175, %174 : vector<8x32xf32>
    %177 = arith.divf %175, %176 : vector<8x32xf32>
    %178 = arith.mulf %169, %150 : vector<8x32xf32>
    %179 = arith.mulf %163, %171 : vector<8x32xf32>
    %180 = arith.addf %178, %179 : vector<8x32xf32>
    %181 = math.tanh %180 : vector<8x32xf32>
    %182 = arith.mulf %177, %181 : vector<8x32xf32>
    %c6_i32 = arith.constant 6 : i32
    %183 = arith.index_cast %c6_i32 : i32 to index
    %c0_38 = arith.constant 0 : index
    %c0_39 = arith.constant 0 : index
    %184 = vector.load %arg1[%183, %c0_38, %c0_39] : memref<8x8x128xf32, #tpu.memory_space<vmem>>, vector<1x8x128xf32>
    %185 = vector.shape_cast %184 : vector<1x8x128xf32> to vector<8x128xf32>
    %cst_40 = arith.constant dense<0.000000e+00> : vector<8x128xf32>
    %186 = tpu.matmul %182, %0, %cst_40 {dimension_numbers = #tpu.dot_dimension_numbers<[1], [0], [0], [1], [0, 0, 1, 1], [], []>} : vector<8x32xf32>, vector<32x128xf32>, vector<8x128xf32> -> vector<8x128xf32>
    %187 = arith.addf %185, %186 : vector<8x128xf32>
    %188 = vector.extract_strided_slice %187 {offsets = [0, 0], sizes = [8, 32], strides = [1, 1]} : vector<8x128xf32> to vector<8x32xf32>
    %189 = arith.negf %188 : vector<8x32xf32>
    %190 = math.exp %189 : vector<8x32xf32>
    %cst_41 = arith.constant 1.000000e+00 : f32
    %191 = vector.broadcast %cst_41 : f32 to vector<8x32xf32>
    %192 = arith.addf %191, %190 : vector<8x32xf32>
    %193 = arith.divf %191, %192 : vector<8x32xf32>
    %194 = vector.extract_strided_slice %187 {offsets = [0, 32], sizes = [8, 32], strides = [1, 1]} : vector<8x128xf32> to vector<8x32xf32>
    %195 = arith.negf %194 : vector<8x32xf32>
    %196 = math.exp %195 : vector<8x32xf32>
    %cst_42 = arith.constant 1.000000e+00 : f32
    %197 = vector.broadcast %cst_42 : f32 to vector<8x32xf32>
    %198 = arith.addf %197, %196 : vector<8x32xf32>
    %199 = arith.divf %197, %198 : vector<8x32xf32>
    %200 = vector.extract_strided_slice %187 {offsets = [0, 64], sizes = [8, 32], strides = [1, 1]} : vector<8x128xf32> to vector<8x32xf32>
    %201 = math.tanh %200 : vector<8x32xf32>
    %202 = vector.extract_strided_slice %187 {offsets = [0, 96], sizes = [8, 32], strides = [1, 1]} : vector<8x128xf32> to vector<8x32xf32>
    %203 = arith.negf %202 : vector<8x32xf32>
    %204 = math.exp %203 : vector<8x32xf32>
    %cst_43 = arith.constant 1.000000e+00 : f32
    %205 = vector.broadcast %cst_43 : f32 to vector<8x32xf32>
    %206 = arith.addf %205, %204 : vector<8x32xf32>
    %207 = arith.divf %205, %206 : vector<8x32xf32>
    %208 = arith.mulf %199, %180 : vector<8x32xf32>
    %209 = arith.mulf %193, %201 : vector<8x32xf32>
    %210 = arith.addf %208, %209 : vector<8x32xf32>
    %211 = math.tanh %210 : vector<8x32xf32>
    %212 = arith.mulf %207, %211 : vector<8x32xf32>
    %c7_i32 = arith.constant 7 : i32
    %213 = arith.index_cast %c7_i32 : i32 to index
    %c0_44 = arith.constant 0 : index
    %c0_45 = arith.constant 0 : index
    %214 = vector.load %arg1[%213, %c0_44, %c0_45] : memref<8x8x128xf32, #tpu.memory_space<vmem>>, vector<1x8x128xf32>
    %215 = vector.shape_cast %214 : vector<1x8x128xf32> to vector<8x128xf32>
    %cst_46 = arith.constant dense<0.000000e+00> : vector<8x128xf32>
    %216 = tpu.matmul %212, %0, %cst_46 {dimension_numbers = #tpu.dot_dimension_numbers<[1], [0], [0], [1], [0, 0, 1, 1], [], []>} : vector<8x32xf32>, vector<32x128xf32>, vector<8x128xf32> -> vector<8x128xf32>
    %217 = arith.addf %215, %216 : vector<8x128xf32>
    %218 = vector.extract_strided_slice %217 {offsets = [0, 0], sizes = [8, 32], strides = [1, 1]} : vector<8x128xf32> to vector<8x32xf32>
    %219 = arith.negf %218 : vector<8x32xf32>
    %220 = math.exp %219 : vector<8x32xf32>
    %cst_47 = arith.constant 1.000000e+00 : f32
    %221 = vector.broadcast %cst_47 : f32 to vector<8x32xf32>
    %222 = arith.addf %221, %220 : vector<8x32xf32>
    %223 = arith.divf %221, %222 : vector<8x32xf32>
    %224 = vector.extract_strided_slice %217 {offsets = [0, 32], sizes = [8, 32], strides = [1, 1]} : vector<8x128xf32> to vector<8x32xf32>
    %225 = arith.negf %224 : vector<8x32xf32>
    %226 = math.exp %225 : vector<8x32xf32>
    %cst_48 = arith.constant 1.000000e+00 : f32
    %227 = vector.broadcast %cst_48 : f32 to vector<8x32xf32>
    %228 = arith.addf %227, %226 : vector<8x32xf32>
    %229 = arith.divf %227, %228 : vector<8x32xf32>
    %230 = vector.extract_strided_slice %217 {offsets = [0, 64], sizes = [8, 32], strides = [1, 1]} : vector<8x128xf32> to vector<8x32xf32>
    %231 = math.tanh %230 : vector<8x32xf32>
    %232 = vector.extract_strided_slice %217 {offsets = [0, 96], sizes = [8, 32], strides = [1, 1]} : vector<8x128xf32> to vector<8x32xf32>
    %233 = arith.negf %232 : vector<8x32xf32>
    %234 = math.exp %233 : vector<8x32xf32>
    %cst_49 = arith.constant 1.000000e+00 : f32
    %235 = vector.broadcast %cst_49 : f32 to vector<8x32xf32>
    %236 = arith.addf %235, %234 : vector<8x32xf32>
    %237 = arith.divf %235, %236 : vector<8x32xf32>
    %238 = arith.mulf %229, %210 : vector<8x32xf32>
    %239 = arith.mulf %223, %231 : vector<8x32xf32>
    %240 = arith.addf %238, %239 : vector<8x32xf32>
    %241 = math.tanh %240 : vector<8x32xf32>
    %242 = arith.mulf %237, %241 : vector<8x32xf32>
    %c8_i32 = arith.constant 8 : i32
    %c0_50 = arith.constant 0 : index
    %c0_51 = arith.constant 0 : index
    %243 = vector.load %arg3[%c0_50, %c0_51] : memref<8x32xf32, #tpu.memory_space<vmem>>, vector<8x32xf32>
    tpu.vector_store %arg3[%c0_50, %c0_51], %242 {strides = array<i32>} : memref<8x32xf32, #tpu.memory_space<vmem>>, vector<8x32xf32>,
    return
  }
  func.func @transform_0(%arg0: i32) -> (i32, i32, i32) {
    %c0_i32 = arith.constant 0 : i32
    %c0_i32_0 = arith.constant 0 : i32
    %c0_i32_1 = arith.constant 0 : i32
    return %c0_i32, %arg0, %c0_i32_0 : i32, i32, i32
  }
  func.func @transform_1(%arg0: i32) -> (i32, i32) {
    %c0_i32 = arith.constant 0 : i32
    %c0_i32_0 = arith.constant 0 : i32
    %c0_i32_1 = arith.constant 0 : i32
    return %c0_i32, %c0_i32_0 : i32, i32
  }
  func.func @transform_2(%arg0: i32) -> (i32, i32) {
    %c0_i32 = arith.constant 0 : i32
    %c0_i32_0 = arith.constant 0 : i32
    return %arg0, %c0_i32 : i32, i32
  }
}

</mosaic_0001>

<llo_original>
// kernel: tpu_custom_call.1
$region0: #{tpu_custom_call.1}
  #allocation0 [shape = 'u32[]', space=smem, size = 0x4, offset = 0x4, fixed_abs, tag = 'smem constant byte address 0x4 - core index']
  #allocation1 [shape = 'u32[144,128]{1,0:T(1,128)}', space=vmem, size = 0x12000, scoped, tag = 'internal scratch']
  %s0 = inlined_call_operand.hbm [shape: f32[8,8,128], index: 0, kind: input, shape index: {}]
  %s1 = inlined_call_operand.hbm [shape: f32[32,128], index: 1, kind: input, shape index: {}]
  %s2 = inlined_call_operand.hbm [shape: f32[8,32], index: 2, kind: output, shape index: {}]
  %s3 = sld [smem:[#allocation0]]
  $region26: #{tpu_custom_call.1} parent=0
    _
  %s5 = ssub.s32 1, %s3
  %s6 = scalar_select 0, %s5, %s3
  $region1: #{tpu_custom_call.1} parent=0
    #allocation2 [shape = 'u8[32768]{0}', space=vmem, size = 0x8000, scoped, tag = 'input window, operand 0, single buffered']
    #allocation3 [shape = 's32[1]{0}', space=sflag, size = 0x4, scoped, tag = 'scoped memory for tpu_custom_call.1']
    #allocation4 [shape = 's32[1]{0}', space=sflag, size = 0x4, scoped, tag = 'scoped memory for tpu_custom_call.1']
    #allocation5 [shape = 'u8[16384]{0}', space=vmem, size = 0x4000, scoped, tag = 'input window, operand 1, single buffered']
    #allocation6 [shape = 's32[1]{0}', space=sflag, size = 0x4, scoped, tag = 'scoped memory for tpu_custom_call.1']
    #allocation7 [shape = 'u8[4096]{0}', space=vmem, size = 0x1000, scoped, tag = 'output window, operand 0, single buffered']
    %7 = vsyncpa [#allocation3], 0
    %8 = vsyncpa [#allocation6], 0
    %9 = vsyncpa [#allocation4], 0
    // Predicated region
    $region2: #{tpu_custom_call.1} parent=1 // pred_check
      _
    $region3: #{tpu_custom_call.1} parent=1 // pred_check_branch
      %11 = sbr.rel (0) target = $region5
    $region4: #{tpu_custom_call.1} parent=1 // pred_region
      %s13 = ssub.s32 1024, 1024
      %14 = vsyncadd [#allocation3], %s13
      %s15 = sshll.u32 [#allocation2], 4
      %s16 = int_to_ptr.vmem [resolvable:$true] %s15
      %21 = dma.hbm_to_vmem [thread:$0]  %s0, 1024, %s16, [#allocation3], 128, 128, 8
    $region5: #{tpu_custom_call.1} parent=1 // pred_fallthru
      _
    // Predicated region
    $region6: #{tpu_custom_call.1} parent=1 // pred_check
      _
    $region7: #{tpu_custom_call.1} parent=1 // pred_check_branch
      %23 = sbr.rel (0) target = $region9
    $region8: #{tpu_custom_call.1} parent=1 // pred_region
      %s25 = ssub.s32 512, 512
      %26 = vsyncadd [#allocation6], %s25
      %s27 = sshll.u32 [#allocation5], 4
      %s28 = int_to_ptr.vmem [resolvable:$true] %s27
      %33 = dma.hbm_to_vmem [thread:$0]  %s1, 512, %s28, [#allocation6], 128, 128, 8
    $region9: #{tpu_custom_call.1} parent=1 // pred_fallthru
      _
    // Predicated region
    $region10: #{tpu_custom_call.1} parent=1 // pred_check
      _
    $region11: #{tpu_custom_call.1} parent=1 // pred_check_branch
      %35 = sbr.rel (0) target = $region13
    $region12: #{tpu_custom_call.1} parent=1 // pred_region
      %36 = dma.done [#allocation3], 1024
    $region13: #{tpu_custom_call.1} parent=1 // pred_fallthru
      _
    // Predicated region
    $region14: #{tpu_custom_call.1} parent=1 // pred_check
      _
    $region15: #{tpu_custom_call.1} parent=1 // pred_check_branch
      %38 = sbr.rel (0) target = $region17
    $region16: #{tpu_custom_call.1} parent=1 // pred_region
      %39 = dma.done [#allocation6], 512
    $region17: #{tpu_custom_call.1} parent=1 // pred_fallthru
      _
    %v40 = vld [vmem:[#allocation5] sm:$0xff]
    %v41 = vld [vmem:[#allocation5 + $0x8] sm:$0xff]
    %v42 = vld [vmem:[#allocation5 + $0x10] sm:$0xff]
    %v43 = vld [vmem:[#allocation5 + $0x18] sm:$0xff]
    %v44 = vld [vmem:[#allocation2] sm:$0xff]
    %vm45 = vcmask 261120
    %v47 = vsel %vm45, 0.0, 0
    %49 = vmatprep.subr.mxu0 0.0
    %50 = vmatpush1.msra.mxu0 %v40
    %51 = vmatprep.subr.mxu0 0.0
    %52 = vmatpush1.msra.mxu0 %v41
    %53 = vmatprep.subr.mxu0 0.0
    %54 = vmatpush1.msra.mxu0 %v42
    %55 = vmatprep.subr.mxu0 0.0
    %56 = vmatpush1.msra.mxu0 %v43
    %57 = vmatprep.subr.mxu0 0.0
    %58 = vmatpush1.msra.mxu0 0.0
    %59 = vmatprep.subr.mxu0 0.0
    %60 = vmatpush1.msra.mxu0 0.0
    %61 = vmatprep.subr.mxu0 0.0
    %62 = vmatpush1.msra.mxu0 0.0
    %63 = vmatprep.subr.mxu0 0.0
    %64 = vmatpush1.msra.mxu0 0.0
    %65 = vmatprep.subr.mxu0 0.0
    %66 = vmatpush1.msra.mxu0 0.0
    %67 = vmatprep.subr.mxu0 0.0
    %68 = vmatpush1.msra.mxu0 0.0
    %69 = vmatprep.subr.mxu0 0.0
    %70 = vmatpush1.msra.mxu0 0.0
    %71 = vmatprep.subr.mxu0 0.0
    %72 = vmatpush1.msra.mxu0 0.0
    %73 = vmatprep.subr.mxu0 0.0
    %74 = vmatpush1.msra.mxu0 0.0
    %75 = vmatprep.subr.mxu0 0.0
    %76 = vmatpush1.msra.mxu0 0.0
    %77 = vmatprep.subr.mxu0 0.0
    %78 = vmatpush1.msra.mxu0 0.0
    %79 = vmatprep.subr.mxu0 0.0
    %80 = vmatpush1.msra.mxu0 0.0
    %81 = vmatprep.subr.mxu0 0.0
    %82 = vmatpush1.msra.mxu0 0.0
    %83 = vmatprep.subr.mxu0 0.0
    %84 = vmatpush1.msra.mxu0 0.0
    %85 = vmatprep.subr.mxu0 0.0
    %86 = vmatpush1.msra.mxu0 0.0
    %87 = vmatprep.subr.mxu0 0.0
    %88 = vmatpush1.msra.mxu0 0.0
    %89 = vmatprep.subr.mxu0 0.0
    %90 = vmatpush1.msra.mxu0 0.0
    %91 = vmatprep.subr.mxu0 0.0
    %92 = vmatpush1.msra.mxu0 0.0
    %93 = vmatprep.subr.mxu0 0.0
    %94 = vmatpush1.msra.mxu0 0.0
    %95 = vmatprep.subr.mxu0 0.0
    %96 = vmatpush1.msra.mxu0 0.0
    %97 = vmatprep.subr.mxu0 0.0
    %98 = vmatpush1.msra.mxu0 0.0
    %99 = vmatprep.subr.mxu0 0.0
    %100 = vmatpush1.msra.mxu0 0.0
    %101 = vmatprep.subr.mxu0 0.0
    %102 = vmatpush1.msra.mxu0 0.0
    %103 = vmatprep.subr.mxu0 0.0
    %104 = vmatpush1.msra.mxu0 0.0
    %105 = vmatprep.subr.mxu0 0.0
    %106 = vmatpush1.msra.mxu0 0.0
    %107 = vmatprep.subr.mxu0 0.0
    %108 = vmatpush1.msra.mxu0 0.0
    %109 = vmatprep.subr.mxu0 0.0
    %110 = vmatpush1.msra.mxu0 0.0
    %111 = vmatprep.subr.mxu0 0.0
    %112 = vmatpush1.msra.mxu0 0.0
    %113 = vmatprep.mubr.f32.mxu0 0.0
    %114 = vmatmul.mubr.f32.gmra.mrb[0].mxu0 %v47
    %v115 = vpop.f32.mrb[0].mxu0
    %v116 = vadd.f32 0.0, %v115
    %v117 = vpop.f32.mrb[0].mxu0
    %118 = vdwg.mxu0
    %v119 = vadd.f32 %v44, %v116
    %v120 = vxor.u32 %v119, 2147483648
    %v121 = vmul.f32 %v120, 1.442695
    %v122 = vpow.pop %v121
    %v123 = vadd.f32 %v122, 1.0
    %v124 = vrcp.pop %v123
    %v125 = vmul.f32 1.0, %v124
    %v126 = vtanh.pop %v119
    %v127 = vmul.f32 %v125, 0.0
    %129 = vrot.lane.b32.xlu0 %v126, 64
    %v130 = vpop.permute.xlu0 %129
    %v132 = vmul.f32 %v125, %v130
    %134 = vrot.lane.b32.xlu0 %v132, 32
    %v135 = vpop.permute.xlu0 %134
    %v137 = vadd.f32 %v127, %v135
    %v138 = vtanh.pop %v137
    %140 = vrot.lane.b32.xlu0 %v138, 64
    %v141 = vpop.permute.xlu0 %140
    %v143 = vmul.f32 %v125, %v141
    %s144 = scalar_lea.vmem [#allocation2], 8
    %v145 = vld [vmem:[%s144] sm:$0xff]
    %147 = vrot.lane.b32.xlu0 %v143, 32
    %v148 = vpop.permute.xlu0 %147
    %v149 = vsel %vm45, %v148, 0
    %151 = vmatprep.subr.mxu0 0.0
    %152 = vmatpush1.msra.mxu0 %v40
    %153 = vmatprep.subr.mxu0 0.0
    %154 = vmatpush1.msra.mxu0 %v41
    %155 = vmatprep.subr.mxu0 0.0
    %156 = vmatpush1.msra.mxu0 %v42
    %157 = vmatprep.subr.mxu0 0.0
    %158 = vmatpush1.msra.mxu0 %v43
    %159 = vmatprep.subr.mxu0 0.0
    %160 = vmatpush1.msra.mxu0 0.0
    %161 = vmatprep.subr.mxu0 0.0
    %162 = vmatpush1.msra.mxu0 0.0
    %163 = vmatprep.subr.mxu0 0.0
    %164 = vmatpush1.msra.mxu0 0.0
    %165 = vmatprep.subr.mxu0 0.0
    %166 = vmatpush1.msra.mxu0 0.0
    %167 = vmatprep.subr.mxu0 0.0
    %168 = vmatpush1.msra.mxu0 0.0
    %169 = vmatprep.subr.mxu0 0.0
    %170 = vmatpush1.msra.mxu0 0.0
    %171 = vmatprep.subr.mxu0 0.0
    %172 = vmatpush1.msra.mxu0 0.0
    %173 = vmatprep.subr.mxu0 0.0
    %174 = vmatpush1.msra.mxu0 0.0
    %175 = vmatprep.subr.mxu0 0.0
    %176 = vmatpush1.msra.mxu0 0.0
    %177 = vmatprep.subr.mxu0 0.0
    %178 = vmatpush1.msra.mxu0 0.0
    %179 = vmatprep.subr.mxu0 0.0
    %180 = vmatpush1.msra.mxu0 0.0
    %181 = vmatprep.subr.mxu0 0.0
    %182 = vmatpush1.msra.mxu0 0.0
    %183 = vmatprep.subr.mxu0 0.0
    %184 = vmatpush1.msra.mxu0 0.0
    %185 = vmatprep.subr.mxu0 0.0
    %186 = vmatpush1.msra.mxu0 0.0
    %187 = vmatprep.subr.mxu0 0.0
    %188 = vmatpush1.msra.mxu0 0.0
    %189 = vmatprep.subr.mxu0 0.0
    %190 = vmatpush1.msra.mxu0 0.0
    %191 = vmatprep.subr.mxu0 0.0
    %192 = vmatpush1.msra.mxu0 0.0
    %193 = vmatprep.subr.mxu0 0.0
    %194 = vmatpush1.msra.mxu0 0.0
    %195 = vmatprep.subr.mxu0 0.0
    %196 = vmatpush1.msra.mxu0 0.0
    %197 = vmatprep.subr.mxu0 0.0
    %198 = vmatpush1.msra.mxu0 0.0
    %199 = vmatprep.subr.mxu0 0.0
    %200 = vmatpush1.msra.mxu0 0.0
    %201 = vmatprep.subr.mxu0 0.0
    %202 = vmatpush1.msra.mxu0 0.0
    %203 = vmatprep.subr.mxu0 0.0
    %204 = vmatpush1.msra.mxu0 0.0
    %205 = vmatprep.subr.mxu0 0.0
    %206 = vmatpush1.msra.mxu0 0.0
    %207 = vmatprep.subr.mxu0 0.0
    %208 = vmatpush1.msra.mxu0 0.0
    %209 = vmatprep.subr.mxu0 0.0
    %210 = vmatpush1.msra.mxu0 0.0
    %211 = vmatprep.subr.mxu0 0.0
    %212 = vmatpush1.msra.mxu0 0.0
    %213 = vmatprep.subr.mxu0 0.0
    %214 = vmatpush1.msra.mxu0 0.0
    %215 = vmatprep.mubr.f32.mxu0 0.0
    %216 = vmatmul.mubr.f32.gmra.mrb[0].mxu0 %v149
    %v217 = vpop.f32.mrb[0].mxu0
    %v218 = vadd.f32 0.0, %v217
    %v219 = vpop.f32.mrb[0].mxu0
    %220 = vdwg.mxu0
    %v221 = vadd.f32 %v145, %v218
    %v222 = vxor.u32 %v221, 2147483648
    %v223 = vmul.f32 %v222, 1.442695
    %v224 = vpow.pop %v223
    %v225 = vadd.f32 %v224, 1.0
    %v226 = vrcp.pop %v225
    %v227 = vmul.f32 1.0, %v226
    %v228 = vtanh.pop %v221
    %v229 = vmul.f32 %v227, %v137
    %231 = vrot.lane.b32.xlu0 %v228, 64
    %v232 = vpop.permute.xlu0 %231
    %v234 = vmul.f32 %v227, %v232
    %236 = vrot.lane.b32.xlu0 %v234, 32
    %v237 = vpop.permute.xlu0 %236
    %v239 = vadd.f32 %v229, %v237
    %v240 = vtanh.pop %v239
    %242 = vrot.lane.b32.xlu0 %v240, 64
    %v243 = vpop.permute.xlu0 %242
    %v245 = vmul.f32 %v227, %v243
    %s246 = scalar_lea.vmem [#allocation2], 16
    %v247 = vld [vmem:[%s246] sm:$0xff]
    %249 = vrot.lane.b32.xlu0 %v245, 32
    %v250 = vpop.permute.xlu0 %249
    %v251 = vsel %vm45, %v250, 0
    %253 = vmatprep.subr.mxu0 0.0
    %254 = vmatpush1.msra.mxu0 %v40
    %255 = vmatprep.subr.mxu0 0.0
    %256 = vmatpush1.msra.mxu0 %v41
    %257 = vmatprep.subr.mxu0 0.0
    %258 = vmatpush1.msra.mxu0 %v42
    %259 = vmatprep.subr.mxu0 0.0
    %260 = vmatpush1.msra.mxu0 %v43
    %261 = vmatprep.subr.mxu0 0.0
    %262 = vmatpush1.msra.mxu0 0.0
    %263 = vmatprep.subr.mxu0 0.0
    %264 = vmatpush1.msra.mxu0 0.0
    %265 = vmatprep.subr.mxu0 0.0
    %266 = vmatpush1.msra.mxu0 0.0
    %267 = vmatprep.subr.mxu0 0.0
    %268 = vmatpush1.msra.mxu0 0.0
    %269 = vmatprep.subr.mxu0 0.0
    %270 = vmatpush1.msra.mxu0 0.0
    %271 = vmatprep.subr.mxu0 0.0
    %272 = vmatpush1.msra.mxu0 0.0
    %273 = vmatprep.subr.mxu0 0.0
    %274 = vmatpush1.msra.mxu0 0.0
    %275 = vmatprep.subr.mxu0 0.0
    %276 = vmatpush1.msra.mxu0 0.0
    %277 = vmatprep.subr.mxu0 0.0
    %278 = vmatpush1.msra.mxu0 0.0
    %279 = vmatprep.subr.mxu0 0.0
    %280 = vmatpush1.msra.mxu0 0.0
    %281 = vmatprep.subr.mxu0 0.0
    %282 = vmatpush1.msra.mxu0 0.0
    %283 = vmatprep.subr.mxu0 0.0
    %284 = vmatpush1.msra.mxu0 0.0
    %285 = vmatprep.subr.mxu0 0.0
    %286 = vmatpush1.msra.mxu0 0.0
    %287 = vmatprep.subr.mxu0 0.0
    %288 = vmatpush1.msra.mxu0 0.0
    %289 = vmatprep.subr.mxu0 0.0
    %290 = vmatpush1.msra.mxu0 0.0
    %291 = vmatprep.subr.mxu0 0.0
    %292 = vmatpush1.msra.mxu0 0.0
    %293 = vmatprep.subr.mxu0 0.0
    %294 = vmatpush1.msra.mxu0 0.0
    %295 = vmatprep.subr.mxu0 0.0
    %296 = vmatpush1.msra.mxu0 0.0
    %297 = vmatprep.subr.mxu0 0.0
    %298 = vmatpush1.msra.mxu0 0.0
    %299 = vmatprep.subr.mxu0 0.0
    %300 = vmatpush1.msra.mxu0 0.0
    %301 = vmatprep.subr.mxu0 0.0
    %302 = vmatpush1.msra.mxu0 0.0
    %303 = vmatprep.subr.mxu0 0.0
    %304 = vmatpush1.msra.mxu0 0.0
    %305 = vmatprep.subr.mxu0 0.0
    %306 = vmatpush1.msra.mxu0 0.0
    %307 = vmatprep.subr.mxu0 0.0
    %308 = vmatpush1.msra.mxu0 0.0
    %309 = vmatprep.subr.mxu0 0.0
    %310 = vmatpush1.msra.mxu0 0.0
    %311 = vmatprep.subr.mxu0 0.0
    %312 = vmatpush1.msra.mxu0 0.0
    %313 = vmatprep.subr.mxu0 0.0
    %314 = vmatpush1.msra.mxu0 0.0
    %315 = vmatprep.subr.mxu0 0.0
    %316 = vmatpush1.msra.mxu0 0.0
    %317 = vmatprep.mubr.f32.mxu0 0.0
    %318 = vmatmul.mubr.f32.gmra.mrb[0].mxu0 %v251
    %v319 = vpop.f32.mrb[0].mxu0
    %v320 = vadd.f32 0.0, %v319
    %v321 = vpop.f32.mrb[0].mxu0
    %322 = vdwg.mxu0
    %v323 = vadd.f32 %v247, %v320
    %v324 = vxor.u32 %v323, 2147483648
    %v325 = vmul.f32 %v324, 1.442695
    %v326 = vpow.pop %v325
    %v327 = vadd.f32 %v326, 1.0
    %v328 = vrcp.pop %v327
    %v329 = vmul.f32 1.0, %v328
    %v330 = vtanh.pop %v323
    %v331 = vmul.f32 %v329, %v239
    %333 = vrot.lane.b32.xlu0 %v330, 64
    %v334 = vpop.permute.xlu0 %333
    %v336 = vmul.f32 %v329, %v334
    %338 = vrot.lane.b32.xlu0 %v336, 32
    %v339 = vpop.permute.xlu0 %338
    %v341 = vadd.f32 %v331, %v339
    %v342 = vtanh.pop %v341
    %344 = vrot.lane.b32.xlu0 %v342, 64
    %v345 = vpop.permute.xlu0 %344
    %v347 = vmul.f32 %v329, %v345
    %s348 = scalar_lea.vmem [#allocation2], 24
    %v349 = vld [vmem:[%s348] sm:$0xff]
    %351 = vrot.lane.b32.xlu0 %v347, 32
    %v352 = vpop.permute.xlu0 %351
    %v353 = vsel %vm45, %v352, 0
    %355 = vmatprep.subr.mxu0 0.0
    %356 = vmatpush1.msra.mxu0 %v40
    %357 = vmatprep.subr.mxu0 0.0
    %358 = vmatpush1.msra.mxu0 %v41
    %359 = vmatprep.subr.mxu0 0.0
    %360 = vmatpush1.msra.mxu0 %v42
    %361 = vmatprep.subr.mxu0 0.0
    %362 = vmatpush1.msra.mxu0 %v43
    %363 = vmatprep.subr.mxu0 0.0
    %364 = vmatpush1.msra.mxu0 0.0
    %365 = vmatprep.subr.mxu0 0.0
    %366 = vmatpush1.msra.mxu0 0.0
    %367 = vmatprep.subr.mxu0 0.0
    %368 = vmatpush1.msra.mxu0 0.0
    %369 = vmatprep.subr.mxu0 0.0
    %370 = vmatpush1.msra.mxu0 0.0
    %371 = vmatprep.subr.mxu0 0.0
    %372 = vmatpush1.msra.mxu0 0.0
    %373 = vmatprep.subr.mxu0 0.0
    %374 = vmatpush1.msra.mxu0 0.0
    %375 = vmatprep.subr.mxu0 0.0
    %376 = vmatpush1.msra.mxu0 0.0
    %377 = vmatprep.subr.mxu0 0.0
    %378 = vmatpush1.msra.mxu0 0.0
    %379 = vmatprep.subr.mxu0 0.0
    %380 = vmatpush1.msra.mxu0 0.0
    %381 = vmatprep.subr.mxu0 0.0
    %382 = vmatpush1.msra.mxu0 0.0
    %383 = vmatprep.subr.mxu0 0.0
    %384 = vmatpush1.msra.mxu0 0.0
    %385 = vmatprep.subr.mxu0 0.0
    %386 = vmatpush1.msra.mxu0 0.0
    %387 = vmatprep.subr.mxu0 0.0
    %388 = vmatpush1.msra.mxu0 0.0
    %389 = vmatprep.subr.mxu0 0.0
    %390 = vmatpush1.msra.mxu0 0.0
    %391 = vmatprep.subr.mxu0 0.0
    %392 = vmatpush1.msra.mxu0 0.0
    %393 = vmatprep.subr.mxu0 0.0
    %394 = vmatpush1.msra.mxu0 0.0
    %395 = vmatprep.subr.mxu0 0.0
    %396 = vmatpush1.msra.mxu0 0.0
    %397 = vmatprep.subr.mxu0 0.0
    %398 = vmatpush1.msra.mxu0 0.0
    %399 = vmatprep.subr.mxu0 0.0
    %400 = vmatpush1.msra.mxu0 0.0
    %401 = vmatprep.subr.mxu0 0.0
    %402 = vmatpush1.msra.mxu0 0.0
    %403 = vmatprep.subr.mxu0 0.0
    %404 = vmatpush1.msra.mxu0 0.0
    %405 = vmatprep.subr.mxu0 0.0
    %406 = vmatpush1.msra.mxu0 0.0
    %407 = vmatprep.subr.mxu0 0.0
    %408 = vmatpush1.msra.mxu0 0.0
    %409 = vmatprep.subr.mxu0 0.0
    %410 = vmatpush1.msra.mxu0 0.0
    %411 = vmatprep.subr.mxu0 0.0
    %412 = vmatpush1.msra.mxu0 0.0
    %413 = vmatprep.subr.mxu0 0.0
    %414 = vmatpush1.msra.mxu0 0.0
    %415 = vmatprep.subr.mxu0 0.0
    %416 = vmatpush1.msra.mxu0 0.0
    %417 = vmatprep.subr.mxu0 0.0
    %418 = vmatpush1.msra.mxu0 0.0
    %419 = vmatprep.mubr.f32.mxu0 0.0
    %420 = vmatmul.mubr.f32.gmra.mrb[0].mxu0 %v353
    %v421 = vpop.f32.mrb[0].mxu0
    %v422 = vadd.f32 0.0, %v421
    %v423 = vpop.f32.mrb[0].mxu0
    %424 = vdwg.mxu0
    %v425 = vadd.f32 %v349, %v422
    %v426 = vxor.u32 %v425, 2147483648
    %v427 = vmul.f32 %v426, 1.442695
    %v428 = vpow.pop %v427
    %v429 = vadd.f32 %v428, 1.0
    %v430 = vrcp.pop %v429
    %v431 = vmul.f32 1.0, %v430
    %v432 = vtanh.pop %v425
    %v433 = vmul.f32 %v431, %v341
    %435 = vrot.lane.b32.xlu0 %v432, 64
    %v436 = vpop.permute.xlu0 %435
    %v438 = vmul.f32 %v431, %v436
    %440 = vrot.lane.b32.xlu0 %v438, 32
    %v441 = vpop.permute.xlu0 %440
    %v443 = vadd.f32 %v433, %v441
    %v444 = vtanh.pop %v443
    %446 = vrot.lane.b32.xlu0 %v444, 64
    %v447 = vpop.permute.xlu0 %446
    %v449 = vmul.f32 %v431, %v447
    %s450 = scalar_lea.vmem [#allocation2], 32
    %v451 = vld [vmem:[%s450] sm:$0xff]
    %453 = vrot.lane.b32.xlu0 %v449, 32
    %v454 = vpop.permute.xlu0 %453
    %v455 = vsel %vm45, %v454, 0
    %457 = vmatprep.subr.mxu0 0.0
    %458 = vmatpush1.msra.mxu0 %v40
    %459 = vmatprep.subr.mxu0 0.0
    %460 = vmatpush1.msra.mxu0 %v41
    %461 = vmatprep.subr.mxu0 0.0
    %462 = vmatpush1.msra.mxu0 %v42
    %463 = vmatprep.subr.mxu0 0.0
    %464 = vmatpush1.msra.mxu0 %v43
    %465 = vmatprep.subr.mxu0 0.0
    %466 = vmatpush1.msra.mxu0 0.0
    %467 = vmatprep.subr.mxu0 0.0
    %468 = vmatpush1.msra.mxu0 0.0
    %469 = vmatprep.subr.mxu0 0.0
    %470 = vmatpush1.msra.mxu0 0.0
    %471 = vmatprep.subr.mxu0 0.0
    %472 = vmatpush1.msra.mxu0 0.0
    %473 = vmatprep.subr.mxu0 0.0
    %474 = vmatpush1.msra.mxu0 0.0
    %475 = vmatprep.subr.mxu0 0.0
    %476 = vmatpush1.msra.mxu0 0.0
    %477 = vmatprep.subr.mxu0 0.0
    %478 = vmatpush1.msra.mxu0 0.0
    %479 = vmatprep.subr.mxu0 0.0
    %480 = vmatpush1.msra.mxu0 0.0
    %481 = vmatprep.subr.mxu0 0.0
    %482 = vmatpush1.msra.mxu0 0.0
    %483 = vmatprep.subr.mxu0 0.0
    %484 = vmatpush1.msra.mxu0 0.0
    %485 = vmatprep.subr.mxu0 0.0
    %486 = vmatpush1.msra.mxu0 0.0
    %487 = vmatprep.subr.mxu0 0.0
    %488 = vmatpush1.msra.mxu0 0.0
    %489 = vmatprep.subr.mxu0 0.0
    %490 = vmatpush1.msra.mxu0 0.0
    %491 = vmatprep.subr.mxu0 0.0
    %492 = vmatpush1.msra.mxu0 0.0
    %493 = vmatprep.subr.mxu0 0.0
    %494 = vmatpush1.msra.mxu0 0.0
    %495 = vmatprep.subr.mxu0 0.0
    %496 = vmatpush1.msra.mxu0 0.0
    %497 = vmatprep.subr.mxu0 0.0
    %498 = vmatpush1.msra.mxu0 0.0
    %499 = vmatprep.subr.mxu0 0.0
    %500 = vmatpush1.msra.mxu0 0.0
    %501 = vmatprep.subr.mxu0 0.0
    %502 = vmatpush1.msra.mxu0 0.0
    %503 = vmatprep.subr.mxu0 0.0
    %504 = vmatpush1.msra.mxu0 0.0
    %505 = vmatprep.subr.mxu0 0.0
    %506 = vmatpush1.msra.mxu0 0.0
    %507 = vmatprep.subr.mxu0 0.0
    %508 = vmatpush1.msra.mxu0 0.0
    %509 = vmatprep.subr.mxu0 0.0
    %510 = vmatpush1.msra.mxu0 0.0
    %511 = vmatprep.subr.mxu0 0.0
    %512 = vmatpush1.msra.mxu0 0.0
    %513 = vmatprep.subr.mxu0 0.0
    %514 = vmatpush1.msra.mxu0 0.0
    %515 = vmatprep.subr.mxu0 0.0
    %516 = vmatpush1.msra.mxu0 0.0
    %517 = vmatprep.subr.mxu0 0.0
    %518 = vmatpush1.msra.mxu0 0.0
    %519 = vmatprep.subr.mxu0 0.0
    %520 = vmatpush1.msra.mxu0 0.0
    %521 = vmatprep.mubr.f32.mxu0 0.0
    %522 = vmatmul.mubr.f32.gmra.mrb[0].mxu0 %v455
    %v523 = vpop.f32.mrb[0].mxu0
    %v524 = vadd.f32 0.0, %v523
    %v525 = vpop.f32.mrb[0].mxu0
    %526 = vdwg.mxu0
    %v527 = vadd.f32 %v451, %v524
    %v528 = vxor.u32 %v527, 2147483648
    %v529 = vmul.f32 %v528, 1.442695
    %v530 = vpow.pop %v529
    %v531 = vadd.f32 %v530, 1.0
    %v532 = vrcp.pop %v531
    %v533 = vmul.f32 1.0, %v532
    %v534 = vtanh.pop %v527
    %v535 = vmul.f32 %v533, %v443
    %537 = vrot.lane.b32.xlu0 %v534, 64
    %v538 = vpop.permute.xlu0 %537
    %v540 = vmul.f32 %v533, %v538
    %542 = vrot.lane.b32.xlu0 %v540, 32
    %v543 = vpop.permute.xlu0 %542
    %v545 = vadd.f32 %v535, %v543
    %v546 = vtanh.pop %v545
    %548 = vrot.lane.b32.xlu0 %v546, 64
    %v549 = vpop.permute.xlu0 %548
    %v551 = vmul.f32 %v533, %v549
    %s552 = scalar_lea.vmem [#allocation2], 40
    %v553 = vld [vmem:[%s552] sm:$0xff]
    %555 = vrot.lane.b32.xlu0 %v551, 32
    %v556 = vpop.permute.xlu0 %555
    %v557 = vsel %vm45, %v556, 0
    %559 = vmatprep.subr.mxu0 0.0
    %560 = vmatpush1.msra.mxu0 %v40
    %561 = vmatprep.subr.mxu0 0.0
    %562 = vmatpush1.msra.mxu0 %v41
    %563 = vmatprep.subr.mxu0 0.0
    %564 = vmatpush1.msra.mxu0 %v42
    %565 = vmatprep.subr.mxu0 0.0
    %566 = vmatpush1.msra.mxu0 %v43
    %567 = vmatprep.subr.mxu0 0.0
    %568 = vmatpush1.msra.mxu0 0.0
    %569 = vmatprep.subr.mxu0 0.0
    %570 = vmatpush1.msra.mxu0 0.0
    %571 = vmatprep.subr.mxu0 0.0
    %572 = vmatpush1.msra.mxu0 0.0
    %573 = vmatprep.subr.mxu0 0.0
    %574 = vmatpush1.msra.mxu0 0.0
    %575 = vmatprep.subr.mxu0 0.0
    %576 = vmatpush1.msra.mxu0 0.0
    %577 = vmatprep.subr.mxu0 0.0
    %578 = vmatpush1.msra.mxu0 0.0
    %579 = vmatprep.subr.mxu0 0.0
    %580 = vmatpush1.msra.mxu0 0.0
    %581 = vmatprep.subr.mxu0 0.0
    %582 = vmatpush1.msra.mxu0 0.0
    %583 = vmatprep.subr.mxu0 0.0
    %584 = vmatpush1.msra.mxu0 0.0
    %585 = vmatprep.subr.mxu0 0.0
    %586 = vmatpush1.msra.mxu0 0.0
    %587 = vmatprep.subr.mxu0 0.0
    %588 = vmatpush1.msra.mxu0 0.0
    %589 = vmatprep.subr.mxu0 0.0
    %590 = vmatpush1.msra.mxu0 0.0
    %591 = vmatprep.subr.mxu0 0.0
    %592 = vmatpush1.msra.mxu0 0.0
    %593 = vmatprep.subr.mxu0 0.0
    %594 = vmatpush1.msra.mxu0 0.0
    %595 = vmatprep.subr.mxu0 0.0
    %596 = vmatpush1.msra.mxu0 0.0
    %597 = vmatprep.subr.mxu0 0.0
    %598 = vmatpush1.msra.mxu0 0.0
    %599 = vmatprep.subr.mxu0 0.0
    %600 = vmatpush1.msra.mxu0 0.0
    %601 = vmatprep.subr.mxu0 0.0
    %602 = vmatpush1.msra.mxu0 0.0
    %603 = vmatprep.subr.mxu0 0.0
    %604 = vmatpush1.msra.mxu0 0.0
    %605 = vmatprep.subr.mxu0 0.0
    %606 = vmatpush1.msra.mxu0 0.0
    %607 = vmatprep.subr.mxu0 0.0
    %608 = vmatpush1.msra.mxu0 0.0
    %609 = vmatprep.subr.mxu0 0.0
    %610 = vmatpush1.msra.mxu0 0.0
    %611 = vmatprep.subr.mxu0 0.0
    %612 = vmatpush1.msra.mxu0 0.0
    %613 = vmatprep.subr.mxu0 0.0
    %614 = vmatpush1.msra.mxu0 0.0
    %615 = vmatprep.subr.mxu0 0.0
    %616 = vmatpush1.msra.mxu0 0.0
    %617 = vmatprep.subr.mxu0 0.0
    %618 = vmatpush1.msra.mxu0 0.0
    %619 = vmatprep.subr.mxu0 0.0
    %620 = vmatpush1.msra.mxu0 0.0
    %621 = vmatprep.subr.mxu0 0.0
    %622 = vmatpush1.msra.mxu0 0.0
    %623 = vmatprep.mubr.f32.mxu0 0.0
    %624 = vmatmul.mubr.f32.gmra.mrb[0].mxu0 %v557
    %v625 = vpop.f32.mrb[0].mxu0
    %v626 = vadd.f32 0.0, %v625
    %v627 = vpop.f32.mrb[0].mxu0
    %628 = vdwg.mxu0
    %v629 = vadd.f32 %v553, %v626
    %v630 = vxor.u32 %v629, 2147483648
    %v631 = vmul.f32 %v630, 1.442695
    %v632 = vpow.pop %v631
    %v633 = vadd.f32 %v632, 1.0
    %v634 = vrcp.pop %v633
    %v635 = vmul.f32 1.0, %v634
    %v636 = vtanh.pop %v629
    %v637 = vmul.f32 %v635, %v545
    %639 = vrot.lane.b32.xlu0 %v636, 64
    %v640 = vpop.permute.xlu0 %639
    %v642 = vmul.f32 %v635, %v640
    %644 = vrot.lane.b32.xlu0 %v642, 32
    %v645 = vpop.permute.xlu0 %644
    %v647 = vadd.f32 %v637, %v645
    %v648 = vtanh.pop %v647
    %650 = vrot.lane.b32.xlu0 %v648, 64
    %v651 = vpop.permute.xlu0 %650
    %v653 = vmul.f32 %v635, %v651
    %s654 = scalar_lea.vmem [#allocation2], 48
    %v655 = vld [vmem:[%s654] sm:$0xff]
    %657 = vrot.lane.b32.xlu0 %v653, 32
    %v658 = vpop.permute.xlu0 %657
    %v659 = vsel %vm45, %v658, 0
    %661 = vmatprep.subr.mxu0 0.0
    %662 = vmatpush1.msra.mxu0 %v40
    %663 = vmatprep.subr.mxu0 0.0
    %664 = vmatpush1.msra.mxu0 %v41
    %665 = vmatprep.subr.mxu0 0.0
    %666 = vmatpush1.msra.mxu0 %v42
    %667 = vmatprep.subr.mxu0 0.0
    %668 = vmatpush1.msra.mxu0 %v43
    %669 = vmatprep.subr.mxu0 0.0
    %670 = vmatpush1.msra.mxu0 0.0
    %671 = vmatprep.subr.mxu0 0.0
    %672 = vmatpush1.msra.mxu0 0.0
    %673 = vmatprep.subr.mxu0 0.0
    %674 = vmatpush1.msra.mxu0 0.0
    %675 = vmatprep.subr.mxu0 0.0
    %676 = vmatpush1.msra.mxu0 0.0
    %677 = vmatprep.subr.mxu0 0.0
    %678 = vmatpush1.msra.mxu0 0.0
    %679 = vmatprep.subr.mxu0 0.0
    %680 = vmatpush1.msra.mxu0 0.0
    %681 = vmatprep.subr.mxu0 0.0
    %682 = vmatpush1.msra.mxu0 0.0
    %683 = vmatprep.subr.mxu0 0.0
    %684 = vmatpush1.msra.mxu0 0.0
    %685 = vmatprep.subr.mxu0 0.0
    %686 = vmatpush1.msra.mxu0 0.0
    %687 = vmatprep.subr.mxu0 0.0
    %688 = vmatpush1.msra.mxu0 0.0
    %689 = vmatprep.subr.mxu0 0.0
    %690 = vmatpush1.msra.mxu0 0.0
    %691 = vmatprep.subr.mxu0 0.0
    %692 = vmatpush1.msra.mxu0 0.0
    %693 = vmatprep.subr.mxu0 0.0
    %694 = vmatpush1.msra.mxu0 0.0
    %695 = vmatprep.subr.mxu0 0.0
    %696 = vmatpush1.msra.mxu0 0.0
    %697 = vmatprep.subr.mxu0 0.0
    %698 = vmatpush1.msra.mxu0 0.0
    %699 = vmatprep.subr.mxu0 0.0
    %700 = vmatpush1.msra.mxu0 0.0
    %701 = vmatprep.subr.mxu0 0.0
    %702 = vmatpush1.msra.mxu0 0.0
    %703 = vmatprep.subr.mxu0 0.0
    %704 = vmatpush1.msra.mxu0 0.0
    %705 = vmatprep.subr.mxu0 0.0
    %706 = vmatpush1.msra.mxu0 0.0
    %707 = vmatprep.subr.mxu0 0.0
    %708 = vmatpush1.msra.mxu0 0.0
    %709 = vmatprep.subr.mxu0 0.0
    %710 = vmatpush1.msra.mxu0 0.0
    %711 = vmatprep.subr.mxu0 0.0
    %712 = vmatpush1.msra.mxu0 0.0
    %713 = vmatprep.subr.mxu0 0.0
    %714 = vmatpush1.msra.mxu0 0.0
    %715 = vmatprep.subr.mxu0 0.0
    %716 = vmatpush1.msra.mxu0 0.0
    %717 = vmatprep.subr.mxu0 0.0
    %718 = vmatpush1.msra.mxu0 0.0
    %719 = vmatprep.subr.mxu0 0.0
    %720 = vmatpush1.msra.mxu0 0.0
    %721 = vmatprep.subr.mxu0 0.0
    %722 = vmatpush1.msra.mxu0 0.0
    %723 = vmatprep.subr.mxu0 0.0
    %724 = vmatpush1.msra.mxu0 0.0
    %725 = vmatprep.mubr.f32.mxu0 0.0
    %726 = vmatmul.mubr.f32.gmra.mrb[0].mxu0 %v659
    %v727 = vpop.f32.mrb[0].mxu0
    %v728 = vadd.f32 0.0, %v727
    %v729 = vpop.f32.mrb[0].mxu0
    %730 = vdwg.mxu0
    %v731 = vadd.f32 %v655, %v728
    %v732 = vxor.u32 %v731, 2147483648
    %v733 = vmul.f32 %v732, 1.442695
    %v734 = vpow.pop %v733
    %v735 = vadd.f32 %v734, 1.0
    %v736 = vrcp.pop %v735
    %v737 = vmul.f32 1.0, %v736
    %v738 = vtanh.pop %v731
    %v739 = vmul.f32 %v737, %v647
    %741 = vrot.lane.b32.xlu0 %v738, 64
    %v742 = vpop.permute.xlu0 %741
    %v744 = vmul.f32 %v737, %v742
    %746 = vrot.lane.b32.xlu0 %v744, 32
    %v747 = vpop.permute.xlu0 %746
    %v749 = vadd.f32 %v739, %v747
    %v750 = vtanh.pop %v749
    %752 = vrot.lane.b32.xlu0 %v750, 64
    %v753 = vpop.permute.xlu0 %752
    %v755 = vmul.f32 %v737, %v753
    %s756 = scalar_lea.vmem [#allocation2], 56
    %v757 = vld [vmem:[%s756] sm:$0xff]
    %759 = vrot.lane.b32.xlu0 %v755, 32
    %v760 = vpop.permute.xlu0 %759
    %v761 = vsel %vm45, %v760, 0
    %763 = vmatprep.subr.mxu0 0.0
    %764 = vmatpush1.msra.mxu0 %v40
    %765 = vmatprep.subr.mxu0 0.0
    %766 = vmatpush1.msra.mxu0 %v41
    %767 = vmatprep.subr.mxu0 0.0
    %768 = vmatpush1.msra.mxu0 %v42
    %769 = vmatprep.subr.mxu0 0.0
    %770 = vmatpush1.msra.mxu0 %v43
    %771 = vmatprep.subr.mxu0 0.0
    %772 = vmatpush1.msra.mxu0 0.0
    %773 = vmatprep.subr.mxu0 0.0
    %774 = vmatpush1.msra.mxu0 0.0
    %775 = vmatprep.subr.mxu0 0.0
    %776 = vmatpush1.msra.mxu0 0.0
    %777 = vmatprep.subr.mxu0 0.0
    %778 = vmatpush1.msra.mxu0 0.0
    %779 = vmatprep.subr.mxu0 0.0
    %780 = vmatpush1.msra.mxu0 0.0
    %781 = vmatprep.subr.mxu0 0.0
    %782 = vmatpush1.msra.mxu0 0.0
    %783 = vmatprep.subr.mxu0 0.0
    %784 = vmatpush1.msra.mxu0 0.0
    %785 = vmatprep.subr.mxu0 0.0
    %786 = vmatpush1.msra.mxu0 0.0
    %787 = vmatprep.subr.mxu0 0.0
    %788 = vmatpush1.msra.mxu0 0.0
    %789 = vmatprep.subr.mxu0 0.0
    %790 = vmatpush1.msra.mxu0 0.0
    %791 = vmatprep.subr.mxu0 0.0
    %792 = vmatpush1.msra.mxu0 0.0
    %793 = vmatprep.subr.mxu0 0.0
    %794 = vmatpush1.msra.mxu0 0.0
    %795 = vmatprep.subr.mxu0 0.0
    %796 = vmatpush1.msra.mxu0 0.0
    %797 = vmatprep.subr.mxu0 0.0
    %798 = vmatpush1.msra.mxu0 0.0
    %799 = vmatprep.subr.mxu0 0.0
    %800 = vmatpush1.msra.mxu0 0.0
    %801 = vmatprep.subr.mxu0 0.0
    %802 = vmatpush1.msra.mxu0 0.0
    %803 = vmatprep.subr.mxu0 0.0
    %804 = vmatpush1.msra.mxu0 0.0
    %805 = vmatprep.subr.mxu0 0.0
    %806 = vmatpush1.msra.mxu0 0.0
    %807 = vmatprep.subr.mxu0 0.0
    %808 = vmatpush1.msra.mxu0 0.0
    %809 = vmatprep.subr.mxu0 0.0
    %810 = vmatpush1.msra.mxu0 0.0
    %811 = vmatprep.subr.mxu0 0.0
    %812 = vmatpush1.msra.mxu0 0.0
    %813 = vmatprep.subr.mxu0 0.0
    %814 = vmatpush1.msra.mxu0 0.0
    %815 = vmatprep.subr.mxu0 0.0
    %816 = vmatpush1.msra.mxu0 0.0
    %817 = vmatprep.subr.mxu0 0.0
    %818 = vmatpush1.msra.mxu0 0.0
    %819 = vmatprep.subr.mxu0 0.0
    %820 = vmatpush1.msra.mxu0 0.0
    %821 = vmatprep.subr.mxu0 0.0
    %822 = vmatpush1.msra.mxu0 0.0
    %823 = vmatprep.subr.mxu0 0.0
    %824 = vmatpush1.msra.mxu0 0.0
    %825 = vmatprep.subr.mxu0 0.0
    %826 = vmatpush1.msra.mxu0 0.0
    %827 = vmatprep.mubr.f32.mxu0 0.0
    %828 = vmatmul.mubr.f32.gmra.mrb[0].mxu0 %v761
    %v829 = vpop.f32.mrb[0].mxu0
    %v830 = vadd.f32 0.0, %v829
    %v831 = vpop.f32.mrb[0].mxu0
    %832 = vdwg.mxu0
    %v833 = vadd.f32 %v757, %v830
    %v834 = vxor.u32 %v833, 2147483648
    %v835 = vmul.f32 %v834, 1.442695
    %v836 = vpow.pop %v835
    %v837 = vadd.f32 %v836, 1.0
    %v838 = vrcp.pop %v837
    %v839 = vmul.f32 1.0, %v838
    %v840 = vtanh.pop %v833
    %v841 = vmul.f32 %v839, %v749
    %843 = vrot.lane.b32.xlu0 %v840, 64
    %v844 = vpop.permute.xlu0 %843
    %v846 = vmul.f32 %v839, %v844
    %848 = vrot.lane.b32.xlu0 %v846, 32
    %v849 = vpop.permute.xlu0 %848
    %v851 = vadd.f32 %v841, %v849
    %v852 = vtanh.pop %v851
    %854 = vrot.lane.b32.xlu0 %v852, 64
    %v855 = vpop.permute.xlu0 %854
    %v857 = vmul.f32 %v839, %v855
    %859 = vrot.lane.b32.xlu0 %v857, 32
    %v860 = vpop.permute.xlu0 %859
    %862 = vst.msk [vmem:[#allocation7] sm:$0xff] %vm45, %v860
    // Predicated region
    $region18: #{tpu_custom_call.1} parent=1 // pred_check
      _
    $region19: #{tpu_custom_call.1} parent=1 // pred_check_branch
      %864 = sbr.rel (0) target = $region21
    $region20: #{tpu_custom_call.1} parent=1 // pred_region
      %s866 = ssub.s32 128, 128
      %867 = vsyncadd [#allocation4], %s866
      %s869 = sshll.u32 [#allocation7], 4
      %s870 = int_to_ptr.vmem [resolvable:$true] %s869
      %872 = dma.vmem_to_hbm [thread:$0]  %s870, 128, %s2, [#allocation4]
    $region21: #{tpu_custom_call.1} parent=1 // pred_fallthru
      _
    // Predicated region
    $region22: #{tpu_custom_call.1} parent=1 // pred_check
      _
    $region23: #{tpu_custom_call.1} parent=1 // pred_check_branch
      %874 = sbr.rel (0) target = $region25
    $region24: #{tpu_custom_call.1} parent=1 // pred_region
      %875 = dma.done [#allocation4], 128
    $region25: #{tpu_custom_call.1} parent=1 // pred_fallthru
      _
    %876 = vsyncpa [#allocation3], 1
    %877 = vsyncpa [#allocation6], 1
    %878 = vsyncpa [#allocation4], 1

</llo_original>
